<compile_context>
chip_gen: v6e
topology: v6e:2x2x1
jax: 0.10.0
libtpu: 0.0.40
codegen_flags: <defaults>
</compile_context>

<pallas_src>
import math
import functools

import jax
import jax.numpy as jnp
from jax.experimental import pallas as pl
from jax.experimental.pallas import tpu as pltpu


_INV_SQRT2 = 1.0 / math.sqrt(2.0)
_TM_CANDIDATES = (1024, 768, 512, 384, 256, 128, 64, 32, 16, 8)
_TK_CANDIDATES = (1024, 512, 384, 256, 128)


def _round_up(x, m):
    return (x + m - 1) // m * m


def _gelu_exact(h):
    # erf-based GELU (EUP), matches torch.nn.functional.gelu default.
    return 0.5 * h * (1.0 + jax.lax.erf(h * _INV_SQRT2))


# ---------------------------------------------------------------------------
# Kernel bodies
# ---------------------------------------------------------------------------
def _ffn_resident_kernel(x_ref, w1_ref, b1_ref, w2_ref, b2_ref, o_ref, *,
                         precision):
    """Weights fully VMEM-resident. Grid = (row tiles,) [parallel]."""
    h = jnp.dot(x_ref[...], w1_ref[...],
                preferred_element_type=jnp.float32, precision=precision)
    h = _gelu_exact(h + b1_ref[...])
    y = jnp.dot(h.astype(w2_ref.dtype), w2_ref[...],
                preferred_element_type=jnp.float32, precision=precision)
    o_ref[...] = (y + b2_ref[...]).astype(o_ref.dtype)


def _ffn_stream_accout_kernel(x_ref, w1_ref, b1_ref, w2_ref, b2_ref, o_ref, *,
                              precision):
    """Streamed hidden reduction, f32 output doubles as the accumulator.

    Grid = (row tiles [parallel], hidden chunks [arbitrary, last]).
    """
    k = pl.program_id(1)

    @pl.when(k == 0)
    def _():
        o_ref[...] = jnp.zeros_like(o_ref)

    h = jnp.dot(x_ref[...], w1_ref[...],
                preferred_element_type=jnp.float32, precision=precision)
    h = _gelu_exact(h + b1_ref[...])
    o_ref[...] += jnp.dot(h.astype(w2_ref.dtype), w2_ref[...],
                          preferred_element_type=jnp.float32,
                          precision=precision)

    @pl.when(k == pl.num_programs(1) - 1)
    def _():
        o_ref[...] += b2_ref[...]


def _ffn_stream_scratch_kernel(x_ref, w1_ref, b1_ref, w2_ref, b2_ref, o_ref,
                               acc_ref, *, precision):
    """Streamed hidden reduction with an f32 scratch accumulator (non-f32 out)."""
    k = pl.program_id(1)

    @pl.when(k == 0)
    def _():
        acc_ref[...] = jnp.zeros_like(acc_ref)

    h = jnp.dot(x_ref[...], w1_ref[...],
                preferred_element_type=jnp.float32, precision=precision)
    h = _gelu_exact(h + b1_ref[...])
    acc_ref[...] += jnp.dot(h.astype(w2_ref.dtype), w2_ref[...],
                            preferred_element_type=jnp.float32,
                            precision=precision)

    @pl.when(k == pl.num_programs(1) - 1)
    def _():
        o_ref[...] = (acc_ref[...] + b2_ref[...]).astype(o_ref.dtype)


# ---------------------------------------------------------------------------
# Tiling / VMEM budgeting
# ---------------------------------------------------------------------------
def _vmem_budget_bytes():
    """(usable budget, physical capacity) per TensorCore."""
    cap = 64 * 1024 * 1024  # conservative default = v7x per-TC VMEM
    try:
        info = pltpu.get_tpu_info()
        cap = int(getattr(info, "vmem_capacity_bytes", cap)) or cap
    except Exception:
        pass
    return int(0.8 * cap), cap


def _vmem_cost(mode, tm, tk, d_in_p, d_hid_p, cbytes, obytes):
    """Estimated VMEM bytes including double-buffered pipeline blocks."""
    bias_bytes = 2 * 8 * (d_in_p + d_hid_p) * 4      # f32 biases, sublane-padded
    if mode == "resident":
        return (2 * (2 * d_in_p * d_hid_p * cbytes)   # W1 + W2 (double-buffered)
                + bias_bytes
                + 2 * tm * d_in_p * cbytes            # x tile
                + 2 * tm * d_in_p * obytes            # out tile
                + tm * d_hid_p * (4 + cbytes))        # h (f32) + cast copy
    return (bias_bytes
            + 2 * tm * d_in_p * cbytes                # x tile
            + 2 * d_in_p * tk * cbytes                # W1 chunk
            + 2 * tk * d_in_p * cbytes                # W2 chunk
            + 2 * tm * d_in_p * obytes                # out tile
            + tm * d_in_p * 4                         # accumulator (worst case)
            + tm * tk * (4 + cbytes))                 # h (f32) + cast copy


def _select_tiles(M, d_in_p, d_hid_p, cbytes, obytes, budget, force_streaming):
    """Pick (mode, tm, tk).  mode in {"resident", "stream"}, tk None if resident."""
    tm_max = min(_TM_CANDIDATES[0], _round_up(M, 8))
    tms = [t for t in _TM_CANDIDATES if t <= tm_max] or [8]

    if not force_streaming:
        for tm in tms:
            if _vmem_cost("resident", tm, None, d_in_p, d_hid_p,
                          cbytes, obytes) <= budget:
                return "resident", tm, None

    # Streamed: prioritise tm (it sets the compute/weight-DMA balance on v6e),
    # then the largest hidden chunk tk that still fits the budget.
    for tm in tms:
        for tk in _TK_CANDIDATES:
            if tk > d_hid_p or d_hid_p % tk != 0:
                continue
            if _vmem_cost("stream", tm, tk, d_in_p, d_hid_p,
                          cbytes, obytes) <= budget:
                return "stream", tm, tk
    return "stream", 8, 128  # last resort (always tiny)


def _ensure_multi_tile(tm, M):
    """>= 2 row tiles when possible so v7x's two TensorCores both get work."""
    while tm > 8 and _round_up(M, tm) // tm < 2:
        tm = max(8, (tm // 2) // 8 * 8)
    return tm


# ---------------------------------------------------------------------------
# Public wrapper
# ---------------------------------------------------------------------------
@functools.partial(jax.jit, static_argnames=("compute_dtype", "force_streaming"))
def positionwise_ffn(x, w1, b1, w2, b2, *, compute_dtype=None,
                     force_streaming=False):
    """Position-wise FFN: gelu(x @ w1 + b1) @ w2 + b2 (dropout = identity).

    x : (B, S, d_in)
    w1: (d_in, d_hid), b1: (d_hid,)   -- nn.Linear(d_in, d_hid), weight transposed
    w2: (d_hid, d_in), b2: (d_in,)    -- nn.Linear(d_hid, d_in), weight transposed
    compute_dtype: MXU operand dtype.  None -> bf16 when x is f32 (f32 accumulate),
                   otherwise x.dtype.  Explicit f32 uses Precision.HIGHEST.
    """
    orig_dtype = x.dtype
    if compute_dtype is None:
        cdt = (jnp.dtype(jnp.bfloat16) if jnp.dtype(orig_dtype) == jnp.float32
               else jnp.dtype(orig_dtype))
    else:
        cdt = jnp.dtype(compute_dtype)
    precision = (jax.lax.Precision.HIGHEST if cdt == jnp.float32
                 else jax.lax.Precision.DEFAULT)

    B, S, d_in = x.shape
    d_hid = w1.shape[1]
    M = B * S

    # Lane-dense padded sizes (multiples of 128 -> unmasked vst, MXU-friendly).
    d_in_p = _round_up(d_in, 128)
    d_hid_p = _round_up(d_hid, 128)

    cbytes = cdt.itemsize
    obytes = jnp.dtype(orig_dtype).itemsize

    budget, vmem_cap = _vmem_budget_bytes()
    mode, tm, tk = _select_tiles(M, d_in_p, d_hid_p, cbytes, obytes,
                                 budget, force_streaming)
    tm = _ensure_multi_tile(tm, M)
    M_p = _round_up(M, tm)
    row_tiles = M_p // tm

    # Zero-pad operands (padded rows/cols contribute exactly 0 to the result).
    x2 = jnp.pad(x.reshape(M, d_in),
                 ((0, M_p - M), (0, d_in_p - d_in))).astype(cdt)
    w1_p = jnp.pad(w1, ((0, d_in_p - d_in), (0, d_hid_p - d_hid))).astype(cdt)
    b1_p = jnp.pad(b1, (0, d_hid_p - d_hid)).reshape(1, d_hid_p).astype(jnp.float32)
    w2_p = jnp.pad(w2, ((0, d_hid_p - d_hid), (0, d_in_p - d_in))).astype(cdt)
    b2_p = jnp.pad(b2, (0, d_in_p - d_in)).reshape(1, d_in_p).astype(jnp.float32)

    if mode == "resident":
        grid = (row_tiles,)
        kernel = functools.partial(_ffn_resident_kernel, precision=precision)
        in_specs = [
            pl.BlockSpec((tm, d_in_p), lambda i: (i, 0)),          # x rows
            pl.BlockSpec((d_in_p, d_hid_p), lambda i: (0, 0)),     # W1 (resident)
            pl.BlockSpec((1, d_hid_p), lambda i: (0, 0)),          # b1 (f32)
            pl.BlockSpec((d_hid_p, d_in_p), lambda i: (0, 0)),     # W2 (resident)
            pl.BlockSpec((1, d_in_p), lambda i: (0, 0)),           # b2 (f32)
        ]
        out_specs = pl.BlockSpec((tm, d_in_p), lambda i: (i, 0))
        scratch_shapes = []
        dim_sem = ("parallel",)
        weight_stream_factor = 1
    else:
        grid = (row_tiles, d_hid_p // tk)
        if jnp.dtype(orig_dtype) == jnp.float32:
            # Accumulate directly into the f32 output block (no scratch, no copy).
            kernel = functools.partial(_ffn_stream_accout_kernel,
                                       precision=precision)
            scratch_shapes = []
        else:
            kernel = functools.partial(_ffn_stream_scratch_kernel,
                                       precision=precision)
            scratch_shapes = [pltpu.VMEM((tm, d_in_p), jnp.float32)]
        in_specs = [
            pl.BlockSpec((tm, d_in_p), lambda i, k: (i, 0)),       # x rows (const over k)
            pl.BlockSpec((d_in_p, tk), lambda i, k: (0, k)),       # W1 hidden chunk
            pl.BlockSpec((1, tk), lambda i, k: (0, k)),            # b1 chunk (f32)
            pl.BlockSpec((tk, d_in_p), lambda i, k: (k, 0)),       # W2 hidden chunk
            pl.BlockSpec((1, d_in_p), lambda i, k: (0, 0)),        # b2 (const, f32)
        ]
        out_specs = pl.BlockSpec((tm, d_in_p), lambda i, k: (i, 0))
        dim_sem = ("parallel", "arbitrary")
        weight_stream_factor = row_tiles

    # VMEM limit: never below the estimate, never above physical capacity.
    vmem_est = _vmem_cost(mode, tm, tk, d_in_p, d_hid_p, cbytes, obytes)
    vmem_limit = int(min(max(vmem_est + (4 << 20), 32 << 20), vmem_cap))

    cost = pl.CostEstimate(
        flops=4 * M_p * d_in_p * d_hid_p,                  # two matmuls
        transcendentals=M_p * d_hid_p,                     # erf
        bytes_accessed=(x2.size * cbytes
                        + weight_stream_factor * (w1_p.size + w2_p.size) * cbytes
                        + (b1_p.size + b2_p.size) * 4
                        + M_p * d_in_p * obytes),
    )

    out = pl.pallas_call(
        kernel,
        out_shape=jax.ShapeDtypeStruct((M_p, d_in_p), orig_dtype),
        grid=grid,
        in_specs=in_specs,
        out_specs=out_specs,
        scratch_shapes=scratch_shapes,
        compiler_params=pltpu.CompilerParams(
            dimension_semantics=dim_sem,
            vmem_limit_bytes=vmem_limit,
        ),
        cost_estimate=cost,
    )(x2, w1_p, b1_p, w2_p, b2_p)

    return out[:M, :d_in].reshape(B, S, d_in)


def _ref_ffn(x, w1, b1, w2, b2):
    h = jnp.dot(x, w1) + b1
    h = 0.5 * h * (1.0 + jax.lax.erf(h * _INV_SQRT2))
    return jnp.dot(h, w2) + b2


if __name__ == "__main__":
    # Small deterministic setup consistent with PositionwiseFeedForward(d_in, d_hid).
    B, S, d_in, d_hid = 2, 8, 32, 64

    key = jax.random.PRNGKey(0)
    kx, k1, k2, kb1, kb2 = jax.random.split(key, 5)

    x = jax.random.normal(kx, (B, S, d_in), dtype=jnp.float32)

    # nn.Linear(d_in, d_hid): weight (d_hid, d_in), bias (d_hid,). Stored transposed.
    bound1 = 1.0 / math.sqrt(d_in)
    w1 = jax.random.uniform(k1, (d_in, d_hid), jnp.float32, -bound1, bound1)
    b1 = jax.random.uniform(kb1, (d_hid,), jnp.float32, -bound1, bound1)

    # nn.Linear(d_hid, d_in): weight (d_in, d_hid), bias (d_in,). Stored transposed.
    bound2 = 1.0 / math.sqrt(d_hid)
    w2 = jax.random.uniform(k2, (d_hid, d_in), jnp.float32, -bound2, bound2)
    b2 = jax.random.uniform(kb2, (d_in,), jnp.float32, -bound2, bound2)

    y_ref = _ref_ffn(x.reshape(-1, d_in), w1, b1, w2, b2).reshape(B, S, d_in)

    # 1) Default path: bf16 MXU operands, weights-resident fast path.
    y = jax.block_until_ready(positionwise_ffn(x, w1, b1, w2, b2))
    assert y.shape == (B, S, d_in)
    assert jnp.allclose(y, y_ref, atol=5e-2, rtol=5e-2), "bf16 resident path mismatch"

    # 2) Exact f32 path (Precision.HIGHEST): tight tolerance.
    y32 = jax.block_until_ready(
        positionwise_ffn(x, w1, b1, w2, b2, compute_dtype=jnp.float32))
    assert jnp.allclose(y32, y_ref, atol=1e-5, rtol=1e-5), "f32 resident path mismatch"

    # 3) Streamed-reduction path, f32 output accumulates directly into o_ref.
    y_s = jax.block_until_ready(
        positionwise_ffn(x, w1, b1, w2, b2, compute_dtype=jnp.float32,
                         force_streaming=True))
    assert jnp.allclose(y_s, y_ref, atol=1e-5, rtol=1e-5), "f32 streamed path mismatch"

    # 4) Streamed path with bf16 output (exercises the scratch-accumulator kernel).
    xb, w1b, b1b, w2b, b2b = (a.astype(jnp.bfloat16) for a in (x, w1, b1, w2, b2))
    y_bf = jax.block_until_ready(
        positionwise_ffn(xb, w1b, b1b, w2b, b2b, force_streaming=True))
    y_ref_bf = _ref_ffn(xb.astype(jnp.float32).reshape(-1, d_in),
                        w1b.astype(jnp.float32), b1b.astype(jnp.float32),
                        w2b.astype(jnp.float32),
                        b2b.astype(jnp.float32)).reshape(B, S, d_in)
    assert y_bf.dtype == jnp.bfloat16
    assert jnp.allclose(y_bf.astype(jnp.float32), y_ref_bf, atol=5e-2, rtol=5e-2), \
        "bf16 streamed path mismatch"

    print("KERNEL_OK")
</pallas_src>

<mosaic_0001>
module attributes {stable_mosaic.version = 11 : i64} {
  func.func @_ffn_resident_kernel(%arg0: i32, %arg1: memref<8x128xbf16, #tpu.memory_space<vmem>>, %arg2: memref<128x128xbf16, #tpu.memory_space<vmem>>, %arg3: memref<1x128xf32, #tpu.memory_space<vmem>>, %arg4: memref<128x128xbf16, #tpu.memory_space<vmem>>, %arg5: memref<1x128xf32, #tpu.memory_space<vmem>>, %arg6: memref<8x128xf32, #tpu.memory_space<vmem>>) attributes {dimension_semantics = [#tpu.dimension_semantics<parallel>], iteration_bounds = array<i64: 2>, scalar_prefetch = 0 : i64, scratch_operands = 0 : i64, tpu.core_type = #tpu.core_type<tc>, window_params = [{transform_indices = @transform_0, window_bounds = array<i64: 8, 128>}, {pipeline_mode = #tpu.pipeline_mode<synchronous>, transform_indices = @transform_1, window_bounds = array<i64: 128, 128>}, {pipeline_mode = #tpu.pipeline_mode<synchronous>, transform_indices = @transform_2, window_bounds = array<i64: 1, 128>}, {pipeline_mode = #tpu.pipeline_mode<synchronous>, transform_indices = @transform_3, window_bounds = array<i64: 128, 128>}, {pipeline_mode = #tpu.pipeline_mode<synchronous>, transform_indices = @transform_4, window_bounds = array<i64: 1, 128>}, {transform_indices = @transform_5, window_bounds = array<i64: 8, 128>}]} {
    %c0 = arith.constant 0 : index
    %c0_0 = arith.constant 0 : index
    %0 = vector.load %arg1[%c0, %c0_0] : memref<8x128xbf16, #tpu.memory_space<vmem>>, vector<8x128xbf16>
    %c0_1 = arith.constant 0 : index
    %c0_2 = arith.constant 0 : index
    %1 = vector.load %arg2[%c0_1, %c0_2] : memref<128x128xbf16, #tpu.memory_space<vmem>>, vector<128x128xbf16>
    %cst = arith.constant dense<0.000000e+00> : vector<8x128xf32>
    %2 = tpu.matmul %0, %1, %cst {dimension_numbers = #tpu.dot_dimension_numbers<[1], [0], [0], [1], [0, 0, 1, 1], [], []>} : vector<8x128xbf16>, vector<128x128xbf16>, vector<8x128xf32> -> vector<8x128xf32>
    %c0_3 = arith.constant 0 : index
    %c0_4 = arith.constant 0 : index
    %3 = vector.load %arg3[%c0_3, %c0_4] : memref<1x128xf32, #tpu.memory_space<vmem>>, vector<1x128xf32>
    %4 = vector.broadcast %3 : vector<1x128xf32> to vector<8x128xf32>
    %5 = arith.addf %2, %4 : vector<8x128xf32>
    %cst_5 = arith.constant 5.000000e-01 : f32
    %6 = vector.broadcast %cst_5 : f32 to vector<8x128xf32>
    %7 = arith.mulf %6, %5 : vector<8x128xf32>
    %cst_6 = arith.constant 0.707106769 : f32
    %8 = vector.broadcast %cst_6 : f32 to vector<8x128xf32>
    %9 = arith.mulf %5, %8 : vector<8x128xf32>
    %10 = math.erf %9 : vector<8x128xf32>
    %cst_7 = arith.constant 1.000000e+00 : f32
    %11 = vector.broadcast %cst_7 : f32 to vector<8x128xf32>
    %12 = arith.addf %11, %10 : vector<8x128xf32>
    %13 = arith.mulf %7, %12 : vector<8x128xf32>
    %14 = arith.truncf %13 : vector<8x128xf32> to vector<8x128xbf16>
    %c0_8 = arith.constant 0 : index
    %c0_9 = arith.constant 0 : index
    %15 = vector.load %arg4[%c0_8, %c0_9] : memref<128x128xbf16, #tpu.memory_space<vmem>>, vector<128x128xbf16>
    %cst_10 = arith.constant dense<0.000000e+00> : vector<8x128xf32>
    %16 = tpu.matmul %14, %15, %cst_10 {dimension_numbers = #tpu.dot_dimension_numbers<[1], [0], [0], [1], [0, 0, 1, 1], [], []>} : vector<8x128xbf16>, vector<128x128xbf16>, vector<8x128xf32> -> vector<8x128xf32>
    %c0_11 = arith.constant 0 : index
    %c0_12 = arith.constant 0 : index
    %17 = vector.load %arg5[%c0_11, %c0_12] : memref<1x128xf32, #tpu.memory_space<vmem>>, vector<1x128xf32>
    %18 = vector.broadcast %17 : vector<1x128xf32> to vector<8x128xf32>
    %19 = arith.addf %16, %18 : vector<8x128xf32>
    %c0_13 = arith.constant 0 : index
    %c0_14 = arith.constant 0 : index
    %20 = vector.load %arg6[%c0_13, %c0_14] : memref<8x128xf32, #tpu.memory_space<vmem>>, vector<8x128xf32>
    tpu.vector_store %arg6[%c0_13, %c0_14], %19 {strides = array<i32>} : memref<8x128xf32, #tpu.memory_space<vmem>>, vector<8x128xf32>,
    return
  }
  func.func @transform_0(%arg0: i32) -> (i32, i32) {
    %c0_i32 = arith.constant 0 : i32
    %c0_i32_0 = arith.constant 0 : i32
    return %arg0, %c0_i32 : i32, i32
  }
  func.func @transform_1(%arg0: i32) -> (i32, i32) {
    %c0_i32 = arith.constant 0 : i32
    %c0_i32_0 = arith.constant 0 : i32
    %c0_i32_1 = arith.constant 0 : i32
    return %c0_i32, %c0_i32_0 : i32, i32
  }
  func.func @transform_2(%arg0: i32) -> (i32, i32) {
    %c0_i32 = arith.constant 0 : i32
    %c0_i32_0 = arith.constant 0 : i32
    %c0_i32_1 = arith.constant 0 : i32
    return %c0_i32, %c0_i32_0 : i32, i32
  }
  func.func @transform_3(%arg0: i32) -> (i32, i32) {
    %c0_i32 = arith.constant 0 : i32
    %c0_i32_0 = arith.constant 0 : i32
    %c0_i32_1 = arith.constant 0 : i32
    return %c0_i32, %c0_i32_0 : i32, i32
  }
  func.func @transform_4(%arg0: i32) -> (i32, i32) {
    %c0_i32 = arith.constant 0 : i32
    %c0_i32_0 = arith.constant 0 : i32
    %c0_i32_1 = arith.constant 0 : i32
    return %c0_i32, %c0_i32_0 : i32, i32
  }
  func.func @transform_5(%arg0: i32) -> (i32, i32) {
    %c0_i32 = arith.constant 0 : i32
    %c0_i32_0 = arith.constant 0 : i32
    return %arg0, %c0_i32 : i32, i32
  }
}

</mosaic_0001>

<llo_original>
// kernel: positionwise_ffn.1
$region0: #{positionwise_ffn.1}
  #allocation0 [shape = 'u32[]', space=smem, size = 0x4, offset = 0x4, fixed_abs, tag = 'smem constant byte address 0x4 - core index']
  #allocation1 [shape = 'u32[144,128]{1,0:T(1,128)}', space=vmem, size = 0x12000, scoped, tag = 'internal scratch']
  %s0 = inlined_call_operand.vmem [shape: bf16[16,128], index: 0, kind: input, shape index: {}]
  %s1 = inlined_call_operand.vmem [shape: bf16[128,128], index: 1, kind: input, shape index: {}]
  %s2 = inlined_call_operand.vmem [shape: f32[1,128], index: 2, kind: input, shape index: {}]
  %s3 = inlined_call_operand.vmem [shape: bf16[128,128], index: 3, kind: input, shape index: {}]
  %s4 = inlined_call_operand.vmem [shape: f32[1,128], index: 4, kind: input, shape index: {}]
  %s5 = inlined_call_operand.vmem [shape: f32[16,128], index: 5, kind: output, shape index: {}]
  %s6 = sld [smem:[#allocation0]]
  $region53: #{positionwise_ffn.1} parent=0
    _
  %s8 = ssub.s32 1, %s6
  %s9 = scalar_select 0, %s8, %s6
  loop: start=0, step=1, limit=4
  $region2: #{positionwise_ffn.1} parent=0 // loop_pre_header
    _
  $region3: #{positionwise_ffn.1} parent=0 // loop_header
    %s11 = sphi 0, %s15
    %p12 = scmp.ge.s32.totalorder %s11, 4
    %s21 = sphi 0, %s23
    %s24 = sphi 0, %s21
    %s25 = sphi 0, %s24
    %s41 = sphi 0, %s25
    %s45 = sphi 0, %s45
    %s47 = sphi 0, %s45
    %s48 = sphi 0, %s47
    %s62 = sphi 0, %s48
    %s66 = sphi 0, %s66
    %s68 = sphi 0, %s66
    %s69 = sphi 0, %s68
    %s83 = sphi 0, %s69
    %s87 = sphi 0, %s87
    %s89 = sphi 0, %s87
    %s90 = sphi 0, %s89
    %s104 = sphi 0, %s90
    %s108 = sphi 0, %s108
    %s110 = sphi 0, %s108
    %s111 = sphi 0, %s110
    %s125 = sphi 0, %s111
    %s131 = sphi 0, %s133
    %s134 = sphi 0, %s131
    %s135 = sphi 0, %s134
    %s151 = sphi 0, %s135
  $region4: #{positionwise_ffn.1} parent=0 // loop_header_branch
    %14 = sbr.rel (%p12) target = $region8
  $region5: #{positionwise_ffn.1} parent=0 // loop_body
    %s16 = ssub.s32 %s11, 1
    %s17 = ssub.s32 %s11, 2
    %s18 = sadd.s32 %s11, 1
    %s19 = ssub.s32 %s11, %s18
    %p20 = scmp.eq.s32.totalorder %s19, 0
    %s22 = sadd.s32 %s21, 1
    %s23 = scalar_select %p20, %s21, %s22
    %p26 = pneg %p20
    %p27 = scmp.eq.s32.totalorder %s11, 1
    %p28 = por %p26, %p27
    %p29 = scmp.ne.s32.totalorder %s21, %s24
    %p30 = scmp.eq.s32.totalorder %s11, 0
    %p31 = por %p29, %p30
    %p32 = scmp.ne.s32.totalorder %s21, %s24
    %p33 = scmp.eq.s32.totalorder %s16, 1
    %p34 = por %p32, %p33
    %p35 = scmp.ne.s32.totalorder %s24, %s25
    %p36 = scmp.eq.s32.totalorder %s16, 0
    %p37 = por %p35, %p36
    %p38 = scmp.ne.s32.totalorder %s24, %s25
    %p39 = scmp.eq.s32.totalorder %s17, 1
    %p40 = por %p38, %p39
    %p42 = scmp.ne.s32.totalorder %s25, %s41
    %p43 = scmp.eq.s32.totalorder %s17, 0
    %p44 = por %p42, %p43
    %s46 = sadd.s32 %s45, 1
    %p49 = scmp.eq.s32.totalorder %s11, 1
    %p50 = scmp.ne.s32.totalorder %s45, %s47
    %p51 = scmp.eq.s32.totalorder %s11, 0
    %p52 = por %p50, %p51
    %p53 = scmp.ne.s32.totalorder %s45, %s47
    %p54 = scmp.eq.s32.totalorder %s16, 1
    %p55 = por %p53, %p54
    %p56 = scmp.ne.s32.totalorder %s47, %s48
    %p57 = scmp.eq.s32.totalorder %s16, 0
    %p58 = por %p56, %p57
    %p59 = scmp.ne.s32.totalorder %s47, %s48
    %p60 = scmp.eq.s32.totalorder %s17, 1
    %p61 = por %p59, %p60
    %p63 = scmp.ne.s32.totalorder %s48, %s62
    %p64 = scmp.eq.s32.totalorder %s17, 0
    %p65 = por %p63, %p64
    %s67 = sadd.s32 %s66, 1
    %p70 = scmp.eq.s32.totalorder %s11, 1
    %p71 = scmp.ne.s32.totalorder %s66, %s68
    %p72 = scmp.eq.s32.totalorder %s11, 0
    %p73 = por %p71, %p72
    %p74 = scmp.ne.s32.totalorder %s66, %s68
    %p75 = scmp.eq.s32.totalorder %s16, 1
    %p76 = por %p74, %p75
    %p77 = scmp.ne.s32.totalorder %s68, %s69
    %p78 = scmp.eq.s32.totalorder %s16, 0
    %p79 = por %p77, %p78
    %p80 = scmp.ne.s32.totalorder %s68, %s69
    %p81 = scmp.eq.s32.totalorder %s17, 1
    %p82 = por %p80, %p81
    %p84 = scmp.ne.s32.totalorder %s69, %s83
    %p85 = scmp.eq.s32.totalorder %s17, 0
    %p86 = por %p84, %p85
    %s88 = sadd.s32 %s87, 1
    %p91 = scmp.eq.s32.totalorder %s11, 1
    %p92 = scmp.ne.s32.totalorder %s87, %s89
    %p93 = scmp.eq.s32.totalorder %s11, 0
    %p94 = por %p92, %p93
    %p95 = scmp.ne.s32.totalorder %s87, %s89
    %p96 = scmp.eq.s32.totalorder %s16, 1
    %p97 = por %p95, %p96
    %p98 = scmp.ne.s32.totalorder %s89, %s90
    %p99 = scmp.eq.s32.totalorder %s16, 0
    %p100 = por %p98, %p99
    %p101 = scmp.ne.s32.totalorder %s89, %s90
    %p102 = scmp.eq.s32.totalorder %s17, 1
    %p103 = por %p101, %p102
    %p105 = scmp.ne.s32.totalorder %s90, %s104
    %p106 = scmp.eq.s32.totalorder %s17, 0
    %p107 = por %p105, %p106
    %s109 = sadd.s32 %s108, 1
    %p112 = scmp.eq.s32.totalorder %s11, 1
    %p113 = scmp.ne.s32.totalorder %s108, %s110
    %p114 = scmp.eq.s32.totalorder %s11, 0
    %p115 = por %p113, %p114
    %p116 = scmp.ne.s32.totalorder %s108, %s110
    %p117 = scmp.eq.s32.totalorder %s16, 1
    %p118 = por %p116, %p117
    %p119 = scmp.ne.s32.totalorder %s110, %s111
    %p120 = scmp.eq.s32.totalorder %s16, 0
    %p121 = por %p119, %p120
    %p122 = scmp.ne.s32.totalorder %s110, %s111
    %p123 = scmp.eq.s32.totalorder %s17, 1
    %p124 = por %p122, %p123
    %p126 = scmp.ne.s32.totalorder %s111, %s125
    %p127 = scmp.eq.s32.totalorder %s17, 0
    %p128 = por %p126, %p127
    %s129 = ssub.s32 %s11, %s18
    %p130 = scmp.eq.s32.totalorder %s129, 0
    %s132 = sadd.s32 %s131, 1
    %s133 = scalar_select %p130, %s131, %s132
    %p136 = pneg %p130
    %p137 = scmp.eq.s32.totalorder %s11, 1
    %p138 = por %p136, %p137
    %p139 = scmp.ne.s32.totalorder %s131, %s134
    %p140 = scmp.eq.s32.totalorder %s11, 0
    %p141 = por %p139, %p140
    %p142 = scmp.ne.s32.totalorder %s131, %s134
    %p143 = scmp.eq.s32.totalorder %s16, 1
    %p144 = por %p142, %p143
    %p145 = scmp.ne.s32.totalorder %s134, %s135
    %p146 = scmp.eq.s32.totalorder %s16, 0
    %p147 = por %p145, %p146
    %p148 = scmp.ne.s32.totalorder %s134, %s135
    %p149 = scmp.eq.s32.totalorder %s17, 1
    %p150 = por %p148, %p149
    %p152 = scmp.ne.s32.totalorder %s135, %s151
    %p153 = scmp.eq.s32.totalorder %s17, 0
    %p154 = por %p152, %p153
    %p155 = scmp.le.s32.totalorder 1, %s11
    %p156 = scmp.lt.s32.totalorder %s11, 3
    %p157 = pnand %p155, %p156
    %p158 = pneg %p157
    // Predicated region
    $region9: #{positionwise_ffn.1} parent=5 // pred_check
      _
    $region10: #{positionwise_ffn.1} parent=5 // pred_check_branch
      %160 = sbr.rel (%p157) target = $region12
    $region11: #{positionwise_ffn.1} parent=5 // pred_region
      %s161 = ssub.s32 %s11, 1
      // Predicated region
      $region13: #{positionwise_ffn.1} parent=11 // pred_check
        %p162 = pneg %p58
      $region14: #{positionwise_ffn.1} parent=11 // pred_check_branch
        %164 = sbr.rel (%p162) target = $region16
      $region15: #{positionwise_ffn.1} parent=11 // pred_region
        _
      $region16: #{positionwise_ffn.1} parent=11 // pred_fallthru
        _
      // Predicated region
      $region17: #{positionwise_ffn.1} parent=11 // pred_check
        %p165 = pneg %p79
      $region18: #{positionwise_ffn.1} parent=11 // pred_check_branch
        %167 = sbr.rel (%p165) target = $region20
      $region19: #{positionwise_ffn.1} parent=11 // pred_region
        _
      $region20: #{positionwise_ffn.1} parent=11 // pred_fallthru
        _
      // Predicated region
      $region21: #{positionwise_ffn.1} parent=11 // pred_check
        %p168 = pneg %p100
      $region22: #{positionwise_ffn.1} parent=11 // pred_check_branch
        %170 = sbr.rel (%p168) target = $region24
      $region23: #{positionwise_ffn.1} parent=11 // pred_region
        _
      $region24: #{positionwise_ffn.1} parent=11 // pred_fallthru
        _
      // Predicated region
      $region25: #{positionwise_ffn.1} parent=11 // pred_check
        %p171 = pneg %p121
      $region26: #{positionwise_ffn.1} parent=11 // pred_check_branch
        %173 = sbr.rel (%p171) target = $region28
      $region27: #{positionwise_ffn.1} parent=11 // pred_region
        _
      $region28: #{positionwise_ffn.1} parent=11 // pred_fallthru
        _
    $region12: #{positionwise_ffn.1} parent=5 // pred_fallthru
      _
    %p174 = scmp.lt.s32.totalorder %s11, 2
    // Predicated region
    $region29: #{positionwise_ffn.1} parent=5 // pred_check
      %p175 = pneg %p174
    $region30: #{positionwise_ffn.1} parent=5 // pred_check_branch
      %177 = sbr.rel (%p175) target = $region32
    $region31: #{positionwise_ffn.1} parent=5 // pred_region
      // Predicated region
      $region33: #{positionwise_ffn.1} parent=31 // pred_check
        %p178 = pneg %p31
      $region34: #{positionwise_ffn.1} parent=31 // pred_check_branch
        %180 = sbr.rel (%p178) target = $region36
      $region35: #{positionwise_ffn.1} parent=31 // pred_region
        %p181 = scmp.lt.s32.totalorder %s11, 1
        %s182 = scalar_select %p181, %s11, 1
        %s183 = smul.addr %s182, 4
        %s184 = scalar_lea.vmem %s0, %s183
      $region36: #{positionwise_ffn.1} parent=31 // pred_fallthru
        _
    $region32: #{positionwise_ffn.1} parent=5 // pred_fallthru
      _
    %p185 = scmp.le.s32.totalorder 1, %s11
    %p186 = scmp.lt.s32.totalorder %s11, 3
    %p187 = pnand %p185, %p186
    %p188 = pneg %p187
    // Predicated region
    $region37: #{positionwise_ffn.1} parent=5 // pred_check
      _
    $region38: #{positionwise_ffn.1} parent=5 // pred_check_branch
      %190 = sbr.rel (%p187) target = $region40
    $region39: #{positionwise_ffn.1} parent=5 // pred_region
      %s191 = ssub.s32 %s11, 1
      %p192 = scmp.lt.s32.totalorder %s16, 1
      %s193 = scalar_select %p192, %s16, 1
      %s194 = smul.addr %s193, 4
      %s195 = scalar_lea.vmem %s0, %s194
      %p196 = pneg %p37
      %p197 = pneg %p34
      %p198 = pneg %p58
      %p199 = pneg %p55
      %p200 = pneg %p79
      %p201 = pneg %p76
      %p202 = pneg %p100
      %p203 = pneg %p97
      %p204 = pneg %p121
      %p205 = pneg %p118
      %p206 = pneg %p147
      %p207 = pneg %p144
      %p208 = scmp.lt.s32.totalorder %s16, 1
      %s209 = scalar_select %p208, %s16, 1
      %s210 = smul.addr %s209, 8
      %s211 = scalar_lea.vmem %s5, %s210
      %p212 = scmp.lt.s32.totalorder %s16, 1
      %s213 = scalar_select %p212, %s16, 1
      %s214 = smul.addr %s213, 4
      %s215 = scalar_lea.vmem %s0, %s214
      %p216 = scmp.lt.s32.totalorder %s16, 1
      %s217 = scalar_select %p216, %s16, 1
      %s218 = smul.addr %s217, 8
      %s219 = scalar_lea.vmem %s5, %s218
      %v221 = vld [vmem:[%s215] sm:$0xf]
      %v222 = vld [vmem:[%s1] sm:$0xf]
      %v223 = vld [vmem:[%s1 + $0x4] sm:$0xf]
      %v224 = vld [vmem:[%s1 + $0x8] sm:$0xf]
      %v225 = vld [vmem:[%s1 + $0xc] sm:$0xf]
      %v226 = vld [vmem:[%s1 + $0x10] sm:$0xf]
      %v227 = vld [vmem:[%s1 + $0x14] sm:$0xf]
      %v228 = vld [vmem:[%s1 + $0x18] sm:$0xf]
      %v229 = vld [vmem:[%s1 + $0x1c] sm:$0xf]
      %v230 = vld [vmem:[%s1 + $0x20] sm:$0xf]
      %v231 = vld [vmem:[%s1 + $0x24] sm:$0xf]
      %v232 = vld [vmem:[%s1 + $0x28] sm:$0xf]
      %v233 = vld [vmem:[%s1 + $0x2c] sm:$0xf]
      %v234 = vld [vmem:[%s1 + $0x30] sm:$0xf]
      %v235 = vld [vmem:[%s1 + $0x34] sm:$0xf]
      %v236 = vld [vmem:[%s1 + $0x38] sm:$0xf]
      %v237 = vld [vmem:[%s1 + $0x3c] sm:$0xf]
      %v238 = vld [vmem:[%s2] sm:$0x1]
      %v240 = vlaneseq
      %v241 = vshrl.u32 %v240, 7
      %v242 = vsub.s32 0, %v241
      %v243 = vrot.slane %v238, %v242
      %v261 = vunpack.c.l.b16 %v222
      %v262 = vunpack.c.l.b16 %v223
      %v263 = vunpack.c.l.b16 %v224
      %v264 = vunpack.c.l.b16 %v225
      %v265 = vunpack.c.l.b16 %v226
      %v266 = vunpack.c.l.b16 %v227
      %v267 = vunpack.c.l.b16 %v228
      %v268 = vunpack.c.l.b16 %v229
      %v269 = vunpack.c.l.b16 %v230
      %v270 = vunpack.c.l.b16 %v231
      %v271 = vunpack.c.l.b16 %v232
      %v272 = vunpack.c.l.b16 %v233
      %v273 = vunpack.c.l.b16 %v234
      %v274 = vunpack.c.l.b16 %v235
      %v275 = vunpack.c.l.b16 %v236
      %v276 = vunpack.c.l.b16 %v237
      %v277 = vpack.c.b16 %v262, %v261
      %v278 = vpack.c.b16 %v264, %v263
      %v279 = vpack.c.b16 %v266, %v265
      %v280 = vpack.c.b16 %v268, %v267
      %v281 = vpack.c.b16 %v270, %v269
      %v282 = vpack.c.b16 %v272, %v271
      %v283 = vpack.c.b16 %v274, %v273
      %v284 = vpack.c.b16 %v276, %v275
      %293 = vmatprep.subr.bf16.mxu0 0
      %294 = vmatpush1.bf16.msra.mxu0 %v284
      %295 = vmatprep.subr.bf16.mxu0 0
      %296 = vmatpush1.bf16.msra.mxu0 %v283
      %297 = vmatprep.subr.bf16.mxu0 0
      %298 = vmatpush1.bf16.msra.mxu0 %v282
      %299 = vmatprep.subr.bf16.mxu0 0
      %300 = vmatpush1.bf16.msra.mxu0 %v281
      %301 = vmatprep.subr.bf16.mxu0 0
      %302 = vmatpush1.bf16.msra.mxu0 %v280
      %303 = vmatprep.subr.bf16.mxu0 0
      %304 = vmatpush1.bf16.msra.mxu0 %v279
      %305 = vmatprep.subr.bf16.mxu0 0
      %306 = vmatpush1.bf16.msra.mxu0 %v278
      %307 = vmatprep.subr.bf16.mxu0 0
      %308 = vmatpush1.bf16.msra.mxu0 %v277
      %309 = vmatprep.subr.bf16.mxu0 0
      %310 = vmatpush2.bf16.msra.mxu0 0
      %311 = vmatprep.subr.bf16.mxu0 0
      %312 = vmatpush2.bf16.msra.mxu0 0
      %313 = vmatprep.subr.bf16.mxu0 0
      %314 = vmatpush2.bf16.msra.mxu0 0
      %315 = vmatprep.subr.bf16.mxu0 0
      %316 = vmatpush2.bf16.msra.mxu0 0
      %317 = vmatprep.subr.bf16.mxu0 0
      %318 = vmatpush2.bf16.msra.mxu0 0
      %319 = vmatprep.subr.bf16.mxu0 0
      %320 = vmatpush2.bf16.msra.mxu0 0
      %321 = vmatprep.subr.bf16.mxu0 0
      %322 = vmatpush2.bf16.msra.mxu0 0
      %323 = vmatprep.subr.bf16.mxu0 0
      %324 = vmatpush2.bf16.msra.mxu0 0
      %325 = vmatprep.mubr.bf16.mxu0 0
      %326 = vmatmul.mubr.bf16.gmra.mxu0 %v221
      %v327 = vpop.f32.mrf.mxu0
      %v328 = vadd.f32 %v243, %v327
      %v329 = vpop.f32.mrf.mxu0
      %v330 = vpop.f32.mrf.mxu0
      %v331 = vpop.f32.mrf.mxu0
      %332 = vdwg.mxu0
      %v333 = vmul.f32 %v328, 0.5
      %v334 = vmul.f32 %v328, 0.70710677
      %v335 = verf.f32.pop %v334
      %v336 = vadd.f32 %v335, 1.0
      %v337 = vmul.f32 %v333, %v336
      %v338 = vpack.c.bf16 %v337, %v337
      %v339 = vld [vmem:[%s3] sm:$0xf]
      %v340 = vld [vmem:[%s3 + $0x4] sm:$0xf]
      %v341 = vld [vmem:[%s3 + $0x8] sm:$0xf]
      %v342 = vld [vmem:[%s3 + $0xc] sm:$0xf]
      %v343 = vld [vmem:[%s3 + $0x10] sm:$0xf]
      %v344 = vld [vmem:[%s3 + $0x14] sm:$0xf]
      %v345 = vld [vmem:[%s3 + $0x18] sm:$0xf]
      %v346 = vld [vmem:[%s3 + $0x1c] sm:$0xf]
      %v347 = vld [vmem:[%s3 + $0x20] sm:$0xf]
      %v348 = vld [vmem:[%s3 + $0x24] sm:$0xf]
      %v349 = vld [vmem:[%s3 + $0x28] sm:$0xf]
      %v350 = vld [vmem:[%s3 + $0x2c] sm:$0xf]
      %v351 = vld [vmem:[%s3 + $0x30] sm:$0xf]
      %v352 = vld [vmem:[%s3 + $0x34] sm:$0xf]
      %v353 = vld [vmem:[%s3 + $0x38] sm:$0xf]
      %v354 = vld [vmem:[%s3 + $0x3c] sm:$0xf]
      %v355 = vld [vmem:[%s4] sm:$0x1]
      %v357 = vlaneseq
      %v358 = vshrl.u32 %v357, 7
      %v359 = vsub.s32 0, %v358
      %v360 = vrot.slane %v355, %v359
      %v378 = vunpack.c.l.b16 %v339
      %v379 = vunpack.c.l.b16 %v340
      %v380 = vunpack.c.l.b16 %v341
      %v381 = vunpack.c.l.b16 %v342
      %v382 = vunpack.c.l.b16 %v343
      %v383 = vunpack.c.l.b16 %v344
      %v384 = vunpack.c.l.b16 %v345
      %v385 = vunpack.c.l.b16 %v346
      %v386 = vunpack.c.l.b16 %v347
      %v387 = vunpack.c.l.b16 %v348
      %v388 = vunpack.c.l.b16 %v349
      %v389 = vunpack.c.l.b16 %v350
      %v390 = vunpack.c.l.b16 %v351
      %v391 = vunpack.c.l.b16 %v352
      %v392 = vunpack.c.l.b16 %v353
      %v393 = vunpack.c.l.b16 %v354
      %v394 = vpack.c.b16 %v379, %v378
      %v395 = vpack.c.b16 %v381, %v380
      %v396 = vpack.c.b16 %v383, %v382
      %v397 = vpack.c.b16 %v385, %v384
      %v398 = vpack.c.b16 %v387, %v386
      %v399 = vpack.c.b16 %v389, %v388
      %v400 = vpack.c.b16 %v391, %v390
      %v401 = vpack.c.b16 %v393, %v392
      %410 = vmatprep.subr.bf16.mxu0 0
      %411 = vmatpush1.bf16.msra.mxu0 %v401
      %412 = vmatprep.subr.bf16.mxu0 0
      %413 = vmatpush1.bf16.msra.mxu0 %v400
      %414 = vmatprep.subr.bf16.mxu0 0
      %415 = vmatpush1.bf16.msra.mxu0 %v399
      %416 = vmatprep.subr.bf16.mxu0 0
      %417 = vmatpush1.bf16.msra.mxu0 %v398
      %418 = vmatprep.subr.bf16.mxu0 0
      %419 = vmatpush1.bf16.msra.mxu0 %v397
      %420 = vmatprep.subr.bf16.mxu0 0
      %421 = vmatpush1.bf16.msra.mxu0 %v396
      %422 = vmatprep.subr.bf16.mxu0 0
      %423 = vmatpush1.bf16.msra.mxu0 %v395
      %424 = vmatprep.subr.bf16.mxu0 0
      %425 = vmatpush1.bf16.msra.mxu0 %v394
      %426 = vmatprep.subr.bf16.mxu0 0
      %427 = vmatpush2.bf16.msra.mxu0 0
      %428 = vmatprep.subr.bf16.mxu0 0
      %429 = vmatpush2.bf16.msra.mxu0 0
      %430 = vmatprep.subr.bf16.mxu0 0
      %431 = vmatpush2.bf16.msra.mxu0 0
      %432 = vmatprep.subr.bf16.mxu0 0
      %433 = vmatpush2.bf16.msra.mxu0 0
      %434 = vmatprep.subr.bf16.mxu0 0
      %435 = vmatpush2.bf16.msra.mxu0 0
      %436 = vmatprep.subr.bf16.mxu0 0
      %437 = vmatpush2.bf16.msra.mxu0 0
      %438 = vmatprep.subr.bf16.mxu0 0
      %439 = vmatpush2.bf16.msra.mxu0 0
      %440 = vmatprep.subr.bf16.mxu0 0
      %441 = vmatpush2.bf16.msra.mxu0 0
      %442 = vmatprep.mubr.bf16.mxu0 0
      %443 = vmatmul.mubr.bf16.gmra.mxu0 %v338
      %v444 = vpop.f32.mrf.mxu0
      %v445 = vadd.f32 %v360, %v444
      %v446 = vpop.f32.mrf.mxu0
      %v447 = vpop.f32.mrf.mxu0
      %v448 = vpop.f32.mrf.mxu0
      %449 = vdwg.mxu0
      %450 = vst [vmem:[%s219] sm:$0xff] %v445
      %p451 = scmp.lt.s32.totalorder %s16, 1
      %s452 = scalar_select %p451, %s16, 1
      %s453 = smul.addr %s452, 8
      %s454 = scalar_lea.vmem %s5, %s453
      // Predicated region
      $region41: #{positionwise_ffn.1} parent=39 // pred_check
        %p455 = pneg %p144
      $region42: #{positionwise_ffn.1} parent=39 // pred_check_branch
        %457 = sbr.rel (%p455) target = $region44
      $region43: #{positionwise_ffn.1} parent=39 // pred_region
        _
      $region44: #{positionwise_ffn.1} parent=39 // pred_fallthru
        _
    $region40: #{positionwise_ffn.1} parent=5 // pred_fallthru
      _
    %p458 = scmp.le.s32.totalorder 2, %s11
    // Predicated region
    $region45: #{positionwise_ffn.1} parent=5 // pred_check
      %p459 = pneg %p458
    $region46: #{positionwise_ffn.1} parent=5 // pred_check_branch
      %461 = sbr.rel (%p459) target = $region48
    $region47: #{positionwise_ffn.1} parent=5 // pred_region
      %s462 = ssub.s32 %s11, 2
      // Predicated region
      $region49: #{positionwise_ffn.1} parent=47 // pred_check
        %p463 = pneg %p150
      $region50: #{positionwise_ffn.1} parent=47 // pred_check_branch
        %465 = sbr.rel (%p463) target = $region52
      $region51: #{positionwise_ffn.1} parent=47 // pred_region
        %p466 = scmp.lt.s32.totalorder %s17, 1
        %s467 = scalar_select %p466, %s17, 1
        %s468 = smul.addr %s467, 8
        %s469 = scalar_lea.vmem %s5, %s468
      $region52: #{positionwise_ffn.1} parent=47 // pred_fallthru
        _
    $region48: #{positionwise_ffn.1} parent=5 // pred_fallthru
      _
  $region6: #{positionwise_ffn.1} parent=0 // loop_footer
    %s15 = sadd.s32 1, %s11
  $region7: #{positionwise_ffn.1} parent=0 // loop_footer_branch
    %10 = sbr.rel target = $region3
  $region8: #{positionwise_ffn.1} parent=0 // loop_exit
    _

</llo_original>
